<compile_context>
chip_gen: v5e
topology: v5e:2x2
jax: 0.10.0
libtpu: 0.0.40
codegen_flags: <defaults>
</compile_context>

<pallas_src>
import math

import jax
import jax.numpy as jnp
from jax.experimental import pallas as pl
from jax.experimental.pallas import tpu as pltpu

LN_EPS = 1e-12


def _embed_kernel(x_ref, g1_ref, b1_ref, w_ref, bl_ref, g2_ref, pe_ref, o_ref):
    """Per (tn, tl) block: LN1 -> (dropout=identity) -> Linear -> ReLU -> LN2 -> +PE."""
    tn, tl, dw = x_ref.shape
    dh = o_ref.shape[-1]

    # Flatten (batch-tile, seq-tile) rows; tl is a multiple of 8 so the merge
    # does not cross (8,128) tile boundaries.
    x = x_ref[...].reshape(tn * tl, dw).astype(jnp.float32)

    # BertLayerNorm #1 over word_vec_size (mean via sum*(1/D), rsqrt on EUP).
    inv_dw = 1.0 / dw
    u = jnp.sum(x, axis=-1, keepdims=True) * inv_dw
    xc = x - u
    s = jnp.sum(xc * xc, axis=-1, keepdims=True) * inv_dw
    xn = xc * jax.lax.rsqrt(s + LN_EPS)
    xn = g1_ref[...] * xn + b1_ref[...]

    # TODO(synk): nn.Dropout omitted (eval-mode identity; training RNG not modeled)

    # Linear(word_vec_size -> hidden_size) + ReLU.
    # MXU operands in the weight's dtype (bf16 by default), f32 accumulation.
    h = jnp.dot(xn.astype(w_ref.dtype), w_ref[...],
                preferred_element_type=jnp.float32)
    h = jnp.maximum(h + bl_ref[...], 0.0)

    # BertLayerNorm #2 over hidden_size.  The LN2 bias is pre-folded into the
    # PE slab on the host, so only the scale is applied here.
    inv_dh = 1.0 / dh
    u2 = jnp.sum(h, axis=-1, keepdims=True) * inv_dh
    hc = h - u2
    s2 = jnp.sum(hc * hc, axis=-1, keepdims=True) * inv_dh
    hn = g2_ref[...] * (hc * jax.lax.rsqrt(s2 + LN_EPS))

    # Positional-encoding (+ folded ln2 bias) add: pe block is (tl, Dh) and
    # broadcasts over the batch-tile axis.
    out = hn.reshape(tn, tl, dh) + pe_ref[...]
    o_ref[...] = out.astype(o_ref.dtype)


def _cdiv(a, b):
    return (a + b - 1) // b


def _round_up(x, m):
    return _cdiv(x, m) * m


def _vmem_limit_bytes():
    """Generation-aware scoped-VMEM request: <=32 MiB on v7x, 64 MiB on v5e/v6e."""
    cap = 128 * 1024 * 1024
    try:
        info = pltpu.get_tpu_info()
        cap = int(getattr(info, "vmem_capacity_bytes", cap))
    except Exception:
        pass
    return int(min(64 * 1024 * 1024, cap // 2))


def prepare_params(params, compute_dtype=jnp.bfloat16):
    """One-time cast of the large tables (vocab embedding, fc weight) to the
    streaming / MXU dtype.  Call once, outside the per-step path, so the full
    (V, Dw) table is not re-cast on every invocation."""
    p = dict(params)
    p["word_embeddings"] = params["word_embeddings"].astype(compute_dtype)
    p["fc_weight"] = params["fc_weight"].astype(compute_dtype)
    return p


def bert_embeddings_text_untied(text_input_ids, params, *, row_block=1024,
                                x_dtype=jnp.bfloat16, out_dtype=jnp.float32):
    """text_input_ids: (N, Lt) int32. Returns (N, Lt, hidden_size) out_dtype.

    row_block: target number of rows (tn*tl) processed per grid step.
    x_dtype:   storage dtype of the streamed gathered embeddings.
    out_dtype: kernel output dtype (bf16 halves the writeback if tolerated).
    """
    word_emb = params["word_embeddings"]                       # (V, Dw)
    g1, b1 = params["ln1_weight"], params["ln1_bias"]          # (Dw,)
    w, bl = params["fc_weight"], params["fc_bias"]             # (Dw, Dh), (Dh,)
    g2, b2 = params["ln2_weight"], params["ln2_bias"]          # (Dh,)
    pe = params["pe"]                                          # (max_t_len, Dh)

    N, Lt = text_input_ids.shape
    Dw = word_emb.shape[1]
    Dh = w.shape[1]

    if Lt > pe.shape[0]:
        raise ValueError(
            f"sequence length {Lt} exceeds positional-encoding table "
            f"max_t_len={pe.shape[0]}")

    # --- tile-size selection ------------------------------------------------
    # seq tile: multiple of 8, chosen to minimize padding (Lt_pad ~= Lt).
    n_seq_tiles = max(1, _cdiv(Lt, row_block))
    tl = int(_round_up(_cdiv(Lt, n_seq_tiles), 8))
    Lt_pad = int(_round_up(Lt, tl))
    # batch tile: pack batch rows until ~row_block rows per step.
    tn = int(max(1, min(N, row_block // max(tl, 1))))
    # Guarantee >=2 grid steps along a parallel axis (v7x megacore) if possible.
    if _cdiv(N, tn) * (Lt_pad // tl) < 2:
        if N >= 2:
            tn = _cdiv(N, 2)
        elif Lt_pad // 8 >= 2:
            tl = int(_round_up(_cdiv(Lt, 2), 8))
            Lt_pad = int(_round_up(Lt, tl))
    N_pad = int(_round_up(N, tn))

    # --- host-side glue (gather + padding; PE is NOT tiled into HBM) --------
    ids = text_input_ids
    if N_pad != N or Lt_pad != Lt:
        # padding_idx=0 -> zero embedding row; padded rows produce finite
        # values (b1 propagated through FC/ReLU/LN2) and are sliced off below.
        ids = jnp.pad(ids, ((0, N_pad - N), (0, Lt_pad - Lt)),
                      constant_values=0)
    emb = word_emb if word_emb.dtype == x_dtype else word_emb.astype(x_dtype)
    x = jnp.take(emb, ids, axis=0)                             # (N_pad, Lt_pad, Dw)

    # Fold the LN2 bias into the PE slab (free on host, removes a VPU add).
    pe_use = pe[:Lt, :].astype(jnp.float32) + b2.reshape(1, Dh).astype(jnp.float32)
    if Lt_pad != Lt:
        pe_use = jnp.pad(pe_use, ((0, Lt_pad - Lt), (0, 0)))

    g1r = g1.reshape(1, Dw).astype(jnp.float32)
    b1r = b1.reshape(1, Dw).astype(jnp.float32)
    blr = bl.reshape(1, Dh).astype(jnp.float32)
    g2r = g2.reshape(1, Dh).astype(jnp.float32)
    # MXU operands in bf16 (f32 accumulation in-kernel).  prepare_params()
    # normally pre-casts this; the fallback cast here is cheap (Dw x Dh).
    wf = w if w.dtype == jnp.bfloat16 else w.astype(jnp.bfloat16)

    grid = (N_pad // tn, Lt_pad // tl)

    out = pl.pallas_call(
        _embed_kernel,
        out_shape=jax.ShapeDtypeStruct((N_pad, Lt_pad, Dh), out_dtype),
        grid_spec=pltpu.PrefetchScalarGridSpec(
            num_scalar_prefetch=0,
            grid=grid,
            in_specs=[
                pl.BlockSpec((tn, tl, Dw), lambda ni, li: (ni, li, 0)),  # x
                pl.BlockSpec((1, Dw), lambda ni, li: (0, 0)),            # ln1 gamma
                pl.BlockSpec((1, Dw), lambda ni, li: (0, 0)),            # ln1 beta
                pl.BlockSpec((Dw, Dh), lambda ni, li: (0, 0)),           # fc weight (bf16, grid-invariant)
                pl.BlockSpec((1, Dh), lambda ni, li: (0, 0)),            # fc bias
                pl.BlockSpec((1, Dh), lambda ni, li: (0, 0)),            # ln2 gamma
                pl.BlockSpec((tl, Dh), lambda ni, li: (li, 0)),          # PE(+b2) rows
            ],
            out_specs=pl.BlockSpec((tn, tl, Dh), lambda ni, li: (ni, li, 0)),
        ),
        compiler_params=pltpu.CompilerParams(
            dimension_semantics=("parallel", "parallel"),
            vmem_limit_bytes=_vmem_limit_bytes(),
        ),
    )(x, g1r, b1r, wf, blr, g2r, pe_use)

    return out[:N, :Lt, :]


def make_position_encoding(n_filters, max_len):
    pe = jnp.zeros((max_len, n_filters), dtype=jnp.float32)
    position = jnp.arange(0, max_len, dtype=jnp.float32)[:, None]
    div_term = jnp.exp(jnp.arange(0, n_filters, 2, dtype=jnp.float32)
                       * -(math.log(10000.0) / n_filters))
    pe = pe.at[:, 0::2].set(jnp.sin(position * div_term))
    pe = pe.at[:, 1::2].set(jnp.cos(position * div_term))
    return pe


def init_params(key, vocab_size, word_vec_size, hidden_size, max_t_len):
    k_emb, k_w, k_b = jax.random.split(key, 3)
    word_embeddings = jax.random.normal(k_emb, (vocab_size, word_vec_size),
                                        dtype=jnp.float32) * 0.02
    word_embeddings = word_embeddings.at[0].set(0.0)   # padding_idx=0 -> zero row
    fc_weight = jax.random.normal(k_w, (word_vec_size, hidden_size),
                                  dtype=jnp.float32) * 0.02
    fc_bias = jax.random.normal(k_b, (hidden_size,), dtype=jnp.float32) * 0.02
    return {
        "word_embeddings": word_embeddings,
        "ln1_weight": jnp.ones((word_vec_size,), jnp.float32),
        "ln1_bias": jnp.zeros((word_vec_size,), jnp.float32),
        "fc_weight": fc_weight,
        "fc_bias": fc_bias,
        "ln2_weight": jnp.ones((hidden_size,), jnp.float32),
        "ln2_bias": jnp.zeros((hidden_size,), jnp.float32),
        "pe": make_position_encoding(hidden_size, max_t_len),
    }


def reference(text_input_ids, params):
    """Pure-JAX f32 reference mirroring the PyTorch forward (eval mode)."""
    x = jnp.take(params["word_embeddings"], text_input_ids, axis=0)
    u = x.mean(-1, keepdims=True)
    s = ((x - u) ** 2).mean(-1, keepdims=True)
    x = (x - u) / jnp.sqrt(s + LN_EPS)
    x = params["ln1_weight"] * x + params["ln1_bias"]
    x = x @ params["fc_weight"] + params["fc_bias"]
    x = jnp.maximum(x, 0.0)
    u = x.mean(-1, keepdims=True)
    s = ((x - u) ** 2).mean(-1, keepdims=True)
    x = (x - u) / jnp.sqrt(s + LN_EPS)
    x = params["ln2_weight"] * x + params["ln2_bias"]
    Lt = text_input_ids.shape[1]
    return x + params["pe"][:Lt, :][None, :, :]


if __name__ == "__main__":
    # Small config consistent with the module
    N, Lt = 2, 8
    vocab_size = 100
    word_vec_size = 32
    hidden_size = 64
    max_t_len = 16

    key = jax.random.PRNGKey(0)
    k_params, k_ids = jax.random.split(key)
    params = init_params(k_params, vocab_size, word_vec_size, hidden_size,
                         max_t_len)
    text_input_ids = jax.random.randint(k_ids, (N, Lt), 0, vocab_size,
                                        dtype=jnp.int32)

    # One-time cast of the large tables to bf16 (outside the call path).
    run_params = prepare_params(params, compute_dtype=jnp.bfloat16)

    out = bert_embeddings_text_untied(text_input_ids, run_params)
    out = jax.block_until_ready(out)

    ref = reference(text_input_ids, params)   # f32 reference
    assert out.shape == (N, Lt, hidden_size)
    # bf16 streaming + bf16 MXU operands vs f32 reference -> loosen tolerance.
    assert jnp.allclose(out, ref, atol=3e-2, rtol=3e-2), "mismatch vs reference"
    print("KERNEL_OK")
</pallas_src>

<mosaic_0001>
module attributes {stable_mosaic.version = 11 : i64} {
  func.func @_embed_kernel(%arg0: i32, %arg1: i32, %arg2: memref<1x8x32xbf16, #tpu.memory_space<vmem>>, %arg3: memref<1x32xf32, #tpu.memory_space<vmem>>, %arg4: memref<1x32xf32, #tpu.memory_space<vmem>>, %arg5: memref<32x64xbf16, #tpu.memory_space<vmem>>, %arg6: memref<1x64xf32, #tpu.memory_space<vmem>>, %arg7: memref<1x64xf32, #tpu.memory_space<vmem>>, %arg8: memref<8x64xf32, #tpu.memory_space<vmem>>, %arg9: memref<1x8x64xf32, #tpu.memory_space<vmem>>) attributes {dimension_semantics = [#tpu.dimension_semantics<parallel>, #tpu.dimension_semantics<parallel>], iteration_bounds = array<i64: 2, 1>, scalar_prefetch = 0 : i64, scratch_operands = 0 : i64, tpu.core_type = #tpu.core_type<tc>, window_params = [{transform_indices = @transform_0, window_bounds = array<i64: 1, 8, 32>}, {pipeline_mode = #tpu.pipeline_mode<synchronous>, transform_indices = @transform_1, window_bounds = array<i64: 1, 32>}, {pipeline_mode = #tpu.pipeline_mode<synchronous>, transform_indices = @transform_2, window_bounds = array<i64: 1, 32>}, {pipeline_mode = #tpu.pipeline_mode<synchronous>, transform_indices = @transform_3, window_bounds = array<i64: 32, 64>}, {pipeline_mode = #tpu.pipeline_mode<synchronous>, transform_indices = @transform_4, window_bounds = array<i64: 1, 64>}, {pipeline_mode = #tpu.pipeline_mode<synchronous>, transform_indices = @transform_5, window_bounds = array<i64: 1, 64>}, {transform_indices = @transform_6, window_bounds = array<i64: 8, 64>}, {transform_indices = @transform_7, window_bounds = array<i64: 1, 8, 64>}]} {
    %c0 = arith.constant 0 : index
    %c0_0 = arith.constant 0 : index
    %c0_1 = arith.constant 0 : index
    %0 = vector.load %arg2[%c0, %c0_0, %c0_1] : memref<1x8x32xbf16, #tpu.memory_space<vmem>>, vector<1x8x32xbf16>
    %1 = vector.shape_cast %0 : vector<1x8x32xbf16> to vector<8x32xbf16>
    %2 = arith.extf %1 : vector<8x32xbf16> to vector<8x32xf32>
    %cst = arith.constant dense<0.000000e+00> : vector<8xf32>
    %3 = vector.multi_reduction <add>, %2, %cst [1] : vector<8x32xf32> to vector<8xf32>
    %4 = vector.shape_cast %3 : vector<8xf32> to vector<8x1xf32>
    %cst_2 = arith.constant 3.125000e-02 : f32
    %5 = vector.broadcast %cst_2 : f32 to vector<8x1xf32>
    %6 = arith.mulf %4, %5 : vector<8x1xf32>
    %7 = vector.broadcast %6 : vector<8x1xf32> to vector<8x32xf32>
    %8 = arith.subf %2, %7 : vector<8x32xf32>
    %9 = arith.mulf %8, %8 : vector<8x32xf32>
    %cst_3 = arith.constant dense<0.000000e+00> : vector<8xf32>
    %10 = vector.multi_reduction <add>, %9, %cst_3 [1] : vector<8x32xf32> to vector<8xf32>
    %11 = vector.shape_cast %10 : vector<8xf32> to vector<8x1xf32>
    %cst_4 = arith.constant 3.125000e-02 : f32
    %12 = vector.broadcast %cst_4 : f32 to vector<8x1xf32>
    %13 = arith.mulf %11, %12 : vector<8x1xf32>
    %cst_5 = arith.constant 9.99999996E-13 : f32
    %14 = vector.broadcast %cst_5 : f32 to vector<8x1xf32>
    %15 = arith.addf %13, %14 : vector<8x1xf32>
    %16 = math.rsqrt %15 : vector<8x1xf32>
    %17 = vector.broadcast %16 : vector<8x1xf32> to vector<8x32xf32>
    %18 = arith.mulf %8, %17 : vector<8x32xf32>
    %c0_6 = arith.constant 0 : index
    %c0_7 = arith.constant 0 : index
    %19 = vector.load %arg3[%c0_6, %c0_7] : memref<1x32xf32, #tpu.memory_space<vmem>>, vector<1x32xf32>
    %20 = vector.broadcast %19 : vector<1x32xf32> to vector<8x32xf32>
    %21 = arith.mulf %20, %18 : vector<8x32xf32>
    %c0_8 = arith.constant 0 : index
    %c0_9 = arith.constant 0 : index
    %22 = vector.load %arg4[%c0_8, %c0_9] : memref<1x32xf32, #tpu.memory_space<vmem>>, vector<1x32xf32>
    %23 = vector.broadcast %22 : vector<1x32xf32> to vector<8x32xf32>
    %24 = arith.addf %21, %23 : vector<8x32xf32>
    %25 = arith.truncf %24 : vector<8x32xf32> to vector<8x32xbf16>
    %c0_10 = arith.constant 0 : index
    %c0_11 = arith.constant 0 : index
    %26 = vector.load %arg5[%c0_10, %c0_11] : memref<32x64xbf16, #tpu.memory_space<vmem>>, vector<32x64xbf16>
    %cst_12 = arith.constant dense<0.000000e+00> : vector<8x64xf32>
    %27 = tpu.matmul %25, %26, %cst_12 {dimension_numbers = #tpu.dot_dimension_numbers<[1], [0], [0], [1], [0, 0, 1, 1], [], []>} : vector<8x32xbf16>, vector<32x64xbf16>, vector<8x64xf32> -> vector<8x64xf32>
    %c0_13 = arith.constant 0 : index
    %c0_14 = arith.constant 0 : index
    %28 = vector.load %arg6[%c0_13, %c0_14] : memref<1x64xf32, #tpu.memory_space<vmem>>, vector<1x64xf32>
    %29 = vector.broadcast %28 : vector<1x64xf32> to vector<8x64xf32>
    %30 = arith.addf %27, %29 : vector<8x64xf32>
    %cst_15 = arith.constant 0.000000e+00 : f32
    %31 = vector.broadcast %cst_15 : f32 to vector<8x64xf32>
    %32 = arith.maximumf %30, %31 : vector<8x64xf32>
    %cst_16 = arith.constant dense<0.000000e+00> : vector<8xf32>
    %33 = vector.multi_reduction <add>, %32, %cst_16 [1] : vector<8x64xf32> to vector<8xf32>
    %34 = vector.shape_cast %33 : vector<8xf32> to vector<8x1xf32>
    %cst_17 = arith.constant 1.562500e-02 : f32
    %35 = vector.broadcast %cst_17 : f32 to vector<8x1xf32>
    %36 = arith.mulf %34, %35 : vector<8x1xf32>
    %37 = vector.broadcast %36 : vector<8x1xf32> to vector<8x64xf32>
    %38 = arith.subf %32, %37 : vector<8x64xf32>
    %39 = arith.mulf %38, %38 : vector<8x64xf32>
    %cst_18 = arith.constant dense<0.000000e+00> : vector<8xf32>
    %40 = vector.multi_reduction <add>, %39, %cst_18 [1] : vector<8x64xf32> to vector<8xf32>
    %41 = vector.shape_cast %40 : vector<8xf32> to vector<8x1xf32>
    %cst_19 = arith.constant 1.562500e-02 : f32
    %42 = vector.broadcast %cst_19 : f32 to vector<8x1xf32>
    %43 = arith.mulf %41, %42 : vector<8x1xf32>
    %c0_20 = arith.constant 0 : index
    %c0_21 = arith.constant 0 : index
    %44 = vector.load %arg7[%c0_20, %c0_21] : memref<1x64xf32, #tpu.memory_space<vmem>>, vector<1x64xf32>
    %cst_22 = arith.constant 9.99999996E-13 : f32
    %45 = vector.broadcast %cst_22 : f32 to vector<8x1xf32>
    %46 = arith.addf %43, %45 : vector<8x1xf32>
    %47 = math.rsqrt %46 : vector<8x1xf32>
    %48 = vector.broadcast %47 : vector<8x1xf32> to vector<8x64xf32>
    %49 = arith.mulf %38, %48 : vector<8x64xf32>
    %50 = vector.broadcast %44 : vector<1x64xf32> to vector<8x64xf32>
    %51 = arith.mulf %50, %49 : vector<8x64xf32>
    %52 = vector.shape_cast %51 : vector<8x64xf32> to vector<1x8x64xf32>
    %c0_23 = arith.constant 0 : index
    %c0_24 = arith.constant 0 : index
    %53 = vector.load %arg8[%c0_23, %c0_24] : memref<8x64xf32, #tpu.memory_space<vmem>>, vector<8x64xf32>
    %54 = vector.shape_cast %53 : vector<8x64xf32> to vector<1x8x64xf32>
    %55 = arith.addf %52, %54 : vector<1x8x64xf32>
    %c0_25 = arith.constant 0 : index
    %c0_26 = arith.constant 0 : index
    %c0_27 = arith.constant 0 : index
    %56 = vector.load %arg9[%c0_25, %c0_26, %c0_27] : memref<1x8x64xf32, #tpu.memory_space<vmem>>, vector<1x8x64xf32>
    tpu.vector_store %arg9[%c0_25, %c0_26, %c0_27], %55 {strides = array<i32>} : memref<1x8x64xf32, #tpu.memory_space<vmem>>, vector<1x8x64xf32>,
    return
  }
  func.func @transform_0(%arg0: i32, %arg1: i32) -> (i32, i32, i32) {
    %c0_i32 = arith.constant 0 : i32
    %c0_i32_0 = arith.constant 0 : i32
    return %arg0, %arg1, %c0_i32 : i32, i32, i32
  }
  func.func @transform_1(%arg0: i32, %arg1: i32) -> (i32, i32) {
    %c0_i32 = arith.constant 0 : i32
    %c0_i32_0 = arith.constant 0 : i32
    %c0_i32_1 = arith.constant 0 : i32
    return %c0_i32, %c0_i32_0 : i32, i32
  }
  func.func @transform_2(%arg0: i32, %arg1: i32) -> (i32, i32) {
    %c0_i32 = arith.constant 0 : i32
    %c0_i32_0 = arith.constant 0 : i32
    %c0_i32_1 = arith.constant 0 : i32
    return %c0_i32, %c0_i32_0 : i32, i32
  }
  func.func @transform_3(%arg0: i32, %arg1: i32) -> (i32, i32) {
    %c0_i32 = arith.constant 0 : i32
    %c0_i32_0 = arith.constant 0 : i32
    %c0_i32_1 = arith.constant 0 : i32
    return %c0_i32, %c0_i32_0 : i32, i32
  }
  func.func @transform_4(%arg0: i32, %arg1: i32) -> (i32, i32) {
    %c0_i32 = arith.constant 0 : i32
    %c0_i32_0 = arith.constant 0 : i32
    %c0_i32_1 = arith.constant 0 : i32
    return %c0_i32, %c0_i32_0 : i32, i32
  }
  func.func @transform_5(%arg0: i32, %arg1: i32) -> (i32, i32) {
    %c0_i32 = arith.constant 0 : i32
    %c0_i32_0 = arith.constant 0 : i32
    %c0_i32_1 = arith.constant 0 : i32
    return %c0_i32, %c0_i32_0 : i32, i32
  }
  func.func @transform_6(%arg0: i32, %arg1: i32) -> (i32, i32) {
    %c0_i32 = arith.constant 0 : i32
    %c0_i32_0 = arith.constant 0 : i32
    return %arg1, %c0_i32 : i32, i32
  }
  func.func @transform_7(%arg0: i32, %arg1: i32) -> (i32, i32, i32) {
    %c0_i32 = arith.constant 0 : i32
    %c0_i32_0 = arith.constant 0 : i32
    return %arg0, %arg1, %c0_i32 : i32, i32, i32
  }
}

</mosaic_0001>

<llo_original>
// kernel: tpu_custom_call.1
$region0: #{tpu_custom_call.1}
  #allocation0 [shape = 'u32[]', space=smem, size = 0x4, offset = 0x4, fixed_abs, tag = 'smem constant byte address 0x4 - core index']
  #allocation1 [shape = 'u32[72,128]{1,0:T(1,128)}', space=vmem, size = 0x9000, scoped, tag = 'internal scratch']
  %s0 = inlined_call_operand.hbm [shape: bf16[2,8,32], index: 0, kind: input, shape index: {}]
  %s1 = inlined_call_operand.hbm [shape: f32[1,32], index: 1, kind: input, shape index: {}]
  %s2 = inlined_call_operand.vmem [shape: f32[1,32], index: 2, kind: input, shape index: {}]
  %s3 = inlined_call_operand.hbm [shape: bf16[32,64], index: 3, kind: input, shape index: {}]
  %s4 = inlined_call_operand.vmem [shape: f32[1,64], index: 4, kind: input, shape index: {}]
  %s5 = inlined_call_operand.vmem [shape: f32[1,64], index: 5, kind: input, shape index: {}]
  %s6 = inlined_call_operand.hbm [shape: f32[8,64], index: 6, kind: input, shape index: {}]
  %s7 = inlined_call_operand.hbm [shape: f32[2,8,64], index: 7, kind: output, shape index: {}]
  %s8 = sld [smem:[#allocation0]]
  $region77: #{tpu_custom_call.1} parent=0
    _
  %s10 = ssub.s32 1, %s8
  %s11 = scalar_select 0, %s10, %s8
  $region1: #{tpu_custom_call.1} parent=0
    #allocation2 [shape = 'u8[4096]{0}', space=vmem, size = 0x1000, scoped, tag = 'input window, operand 0']
    #allocation3 [shape = 's32[2]{0}', space=sflag, size = 0x8, scoped, tag = 'scoped memory for tpu_custom_call.1']
    #allocation4 [shape = 's32[2]{0}', space=sflag, size = 0x8, scoped, tag = 'scoped memory for tpu_custom_call.1']
    #allocation5 [shape = 'u8[512]{0}', space=vmem, size = 0x400, scoped, tag = 'input window, operand 1, single buffered']
    #allocation6 [shape = 's32[1]{0}', space=sflag, size = 0x4, scoped, tag = 'scoped memory for tpu_custom_call.1']
    #allocation7 [shape = 'u8[8192]{0}', space=vmem, size = 0x2000, scoped, tag = 'input window, operand 3, single buffered']
    #allocation8 [shape = 'u8[4096]{0}', space=vmem, size = 0x1000, scoped, tag = 'input window, operand 6, single buffered']
    #allocation9 [shape = 's32[1]{0}', space=sflag, size = 0x4, scoped, tag = 'scoped memory for tpu_custom_call.1']
    #allocation10 [shape = 'u8[8192]{0}', space=vmem, size = 0x2000, scoped, tag = 'output window, operand 0']
    %12 = vsyncpa [#allocation3], 0
    %s13 = scalar_lea.sflag [#allocation3], 1
    %14 = vsyncpa %s13, 0
    %15 = vsyncpa [#allocation6], 0
    %16 = vsyncpa [#allocation9], 0
    %17 = vsyncpa [#allocation4], 0
    %s18 = scalar_lea.sflag [#allocation4], 1
    %19 = vsyncpa %s18, 0
    loop: start=0, step=1, limit=4
    $region2: #{tpu_custom_call.1} parent=1 // loop_pre_header
      _
    $region3: #{tpu_custom_call.1} parent=1 // loop_header
      %s21 = sphi 0, %s25
      %p22 = scmp.ge.s32.totalorder %s21, 4
      %s28 = sphi 0, %s40
      %s29 = sphi 0, %s36
      %s30 = sphi 0, %s28
      %s31 = sphi 0, %s29
      %s32 = sphi 0, %s30
      %s33 = sphi 0, %s31
      %s45 = sphi 0, %s47
      %s48 = sphi 0, %s45
      %s49 = sphi 0, %s48
      %s65 = sphi 0, %s49
      %s69 = sphi 0, %s69
      %s71 = sphi 0, %s69
      %s72 = sphi 0, %s71
      %s86 = sphi 0, %s72
      %s90 = sphi 0, %s90
      %s92 = sphi 0, %s90
      %s93 = sphi 0, %s92
      %s107 = sphi 0, %s93
      %s111 = sphi 0, %s111
      %s113 = sphi 0, %s111
      %s114 = sphi 0, %s113
      %s128 = sphi 0, %s114
      %s132 = sphi 0, %s132
      %s134 = sphi 0, %s132
      %s135 = sphi 0, %s134
      %s149 = sphi 0, %s135
      %s153 = sphi 0, %s153
      %s155 = sphi 0, %s153
      %s156 = sphi 0, %s155
      %s170 = sphi 0, %s156
      %s176 = sphi 0, %s178
      %s179 = sphi 0, %s176
      %s180 = sphi 0, %s179
      %s196 = sphi 0, %s180
      %s204 = sphi 0, %s206
      %s207 = sphi 0, %s204
      %s208 = sphi 0, %s207
      %s224 = sphi 0, %s208
    $region4: #{tpu_custom_call.1} parent=1 // loop_header_branch
      %24 = sbr.rel (%p22) target = $region8
    $region5: #{tpu_custom_call.1} parent=1 // loop_body
      %s26 = ssub.s32 %s21, 1
      %s27 = ssub.s32 %s21, 2
      %s34 = sadd.s32 1, %s29
      %p35 = scmp.ge.s32.totalorder %s34, 1
      %s36 = scalar_select %p35, 0, %s34
      %s37 = sadd.s32 1, %s28
      %s38 = scalar_select %p35, %s37, %s28
      %p39 = scmp.ge.s32.totalorder %s38, 2
      %s40 = scalar_select %p39, 0, %s38
      %s41 = ssub.s32 %s28, %s40
      %s42 = ssub.s32 %s29, %s36
      %s43 = sor.u32 %s41, %s42
      %p44 = scmp.eq.s32.totalorder %s43, 0
      %s46 = sadd.s32 %s45, 1
      %s47 = scalar_select %p44, %s45, %s46
      %p50 = pneg %p44
      %p51 = scmp.eq.s32.totalorder %s21, 1
      %p52 = por %p50, %p51
      %p53 = scmp.ne.s32.totalorder %s45, %s48
      %p54 = scmp.eq.s32.totalorder %s21, 0
      %p55 = por %p53, %p54
      %p56 = scmp.ne.s32.totalorder %s45, %s48
      %p57 = scmp.eq.s32.totalorder %s26, 1
      %p58 = por %p56, %p57
      %p59 = scmp.ne.s32.totalorder %s48, %s49
      %p60 = scmp.eq.s32.totalorder %s26, 0
      %p61 = por %p59, %p60
      %p62 = scmp.ne.s32.totalorder %s48, %s49
      %p63 = scmp.eq.s32.totalorder %s27, 1
      %p64 = por %p62, %p63
      %p66 = scmp.ne.s32.totalorder %s49, %s65
      %p67 = scmp.eq.s32.totalorder %s27, 0
      %p68 = por %p66, %p67
      %s70 = sadd.s32 %s69, 1
      %p73 = scmp.eq.s32.totalorder %s21, 1
      %p74 = scmp.ne.s32.totalorder %s69, %s71
      %p75 = scmp.eq.s32.totalorder %s21, 0
      %p76 = por %p74, %p75
      %p77 = scmp.ne.s32.totalorder %s69, %s71
      %p78 = scmp.eq.s32.totalorder %s26, 1
      %p79 = por %p77, %p78
      %p80 = scmp.ne.s32.totalorder %s71, %s72
      %p81 = scmp.eq.s32.totalorder %s26, 0
      %p82 = por %p80, %p81
      %p83 = scmp.ne.s32.totalorder %s71, %s72
      %p84 = scmp.eq.s32.totalorder %s27, 1
      %p85 = por %p83, %p84
      %p87 = scmp.ne.s32.totalorder %s72, %s86
      %p88 = scmp.eq.s32.totalorder %s27, 0
      %p89 = por %p87, %p88
      %s91 = sadd.s32 %s90, 1
      %p94 = scmp.eq.s32.totalorder %s21, 1
      %p95 = scmp.ne.s32.totalorder %s90, %s92
      %p96 = scmp.eq.s32.totalorder %s21, 0
      %p97 = por %p95, %p96
      %p98 = scmp.ne.s32.totalorder %s90, %s92
      %p99 = scmp.eq.s32.totalorder %s26, 1
      %p100 = por %p98, %p99
      %p101 = scmp.ne.s32.totalorder %s92, %s93
      %p102 = scmp.eq.s32.totalorder %s26, 0
      %p103 = por %p101, %p102
      %p104 = scmp.ne.s32.totalorder %s92, %s93
      %p105 = scmp.eq.s32.totalorder %s27, 1
      %p106 = por %p104, %p105
      %p108 = scmp.ne.s32.totalorder %s93, %s107
      %p109 = scmp.eq.s32.totalorder %s27, 0
      %p110 = por %p108, %p109
      %s112 = sadd.s32 %s111, 1
      %p115 = scmp.eq.s32.totalorder %s21, 1
      %p116 = scmp.ne.s32.totalorder %s111, %s113
      %p117 = scmp.eq.s32.totalorder %s21, 0
      %p118 = por %p116, %p117
      %p119 = scmp.ne.s32.totalorder %s111, %s113
      %p120 = scmp.eq.s32.totalorder %s26, 1
      %p121 = por %p119, %p120
      %p122 = scmp.ne.s32.totalorder %s113, %s114
      %p123 = scmp.eq.s32.totalorder %s26, 0
      %p124 = por %p122, %p123
      %p125 = scmp.ne.s32.totalorder %s113, %s114
      %p126 = scmp.eq.s32.totalorder %s27, 1
      %p127 = por %p125, %p126
      %p129 = scmp.ne.s32.totalorder %s114, %s128
      %p130 = scmp.eq.s32.totalorder %s27, 0
      %p131 = por %p129, %p130
      %s133 = sadd.s32 %s132, 1
      %p136 = scmp.eq.s32.totalorder %s21, 1
      %p137 = scmp.ne.s32.totalorder %s132, %s134
      %p138 = scmp.eq.s32.totalorder %s21, 0
      %p139 = por %p137, %p138
      %p140 = scmp.ne.s32.totalorder %s132, %s134
      %p141 = scmp.eq.s32.totalorder %s26, 1
      %p142 = por %p140, %p141
      %p143 = scmp.ne.s32.totalorder %s134, %s135
      %p144 = scmp.eq.s32.totalorder %s26, 0
      %p145 = por %p143, %p144
      %p146 = scmp.ne.s32.totalorder %s134, %s135
      %p147 = scmp.eq.s32.totalorder %s27, 1
      %p148 = por %p146, %p147
      %p150 = scmp.ne.s32.totalorder %s135, %s149
      %p151 = scmp.eq.s32.totalorder %s27, 0
      %p152 = por %p150, %p151
      %s154 = sadd.s32 %s153, 1
      %p157 = scmp.eq.s32.totalorder %s21, 1
      %p158 = scmp.ne.s32.totalorder %s153, %s155
      %p159 = scmp.eq.s32.totalorder %s21, 0
      %p160 = por %p158, %p159
      %p161 = scmp.ne.s32.totalorder %s153, %s155
      %p162 = scmp.eq.s32.totalorder %s26, 1
      %p163 = por %p161, %p162
      %p164 = scmp.ne.s32.totalorder %s155, %s156
      %p165 = scmp.eq.s32.totalorder %s26, 0
      %p166 = por %p164, %p165
      %p167 = scmp.ne.s32.totalorder %s155, %s156
      %p168 = scmp.eq.s32.totalorder %s27, 1
      %p169 = por %p167, %p168
      %p171 = scmp.ne.s32.totalorder %s156, %s170
      %p172 = scmp.eq.s32.totalorder %s27, 0
      %p173 = por %p171, %p172
      %s174 = ssub.s32 %s29, %s36
      %p175 = scmp.eq.s32.totalorder %s174, 0
      %s177 = sadd.s32 %s176, 1
      %s178 = scalar_select %p175, %s176, %s177
      %p181 = pneg %p175
      %p182 = scmp.eq.s32.totalorder %s21, 1
      %p183 = por %p181, %p182
      %p184 = scmp.ne.s32.totalorder %s176, %s179
      %p185 = scmp.eq.s32.totalorder %s21, 0
      %p186 = por %p184, %p185
      %p187 = scmp.ne.s32.totalorder %s176, %s179
      %p188 = scmp.eq.s32.totalorder %s26, 1
      %p189 = por %p187, %p188
      %p190 = scmp.ne.s32.totalorder %s179, %s180
      %p191 = scmp.eq.s32.totalorder %s26, 0
      %p192 = por %p190, %p191
      %p193 = scmp.ne.s32.totalorder %s179, %s180
      %p194 = scmp.eq.s32.totalorder %s27, 1
      %p195 = por %p193, %p194
      %p197 = scmp.ne.s32.totalorder %s180, %s196
      %p198 = scmp.eq.s32.totalorder %s27, 0
      %p199 = por %p197, %p198
      %s200 = ssub.s32 %s28, %s40
      %s201 = ssub.s32 %s29, %s36
      %s202 = sor.u32 %s200, %s201
      %p203 = scmp.eq.s32.totalorder %s202, 0
      %s205 = sadd.s32 %s204, 1
      %s206 = scalar_select %p203, %s204, %s205
      %p209 = pneg %p203
      %p210 = scmp.eq.s32.totalorder %s21, 1
      %p211 = por %p209, %p210
      %p212 = scmp.ne.s32.totalorder %s204, %s207
      %p213 = scmp.eq.s32.totalorder %s21, 0
      %p214 = por %p212, %p213
      %p215 = scmp.ne.s32.totalorder %s204, %s207
      %p216 = scmp.eq.s32.totalorder %s26, 1
      %p217 = por %p215, %p216
      %p218 = scmp.ne.s32.totalorder %s207, %s208
      %p219 = scmp.eq.s32.totalorder %s26, 0
      %p220 = por %p218, %p219
      %p221 = scmp.ne.s32.totalorder %s207, %s208
      %p222 = scmp.eq.s32.totalorder %s27, 1
      %p223 = por %p221, %p222
      %p225 = scmp.ne.s32.totalorder %s208, %s224
      %p226 = scmp.eq.s32.totalorder %s27, 0
      %p227 = por %p225, %p226
      %p228 = scmp.le.s32.totalorder 1, %s21
      %p229 = scmp.lt.s32.totalorder %s21, 3
      %p230 = pnand %p228, %p229
      %p231 = pneg %p230
      // Predicated region
      $region9: #{tpu_custom_call.1} parent=5 // pred_check
        _
      $region10: #{tpu_custom_call.1} parent=5 // pred_check_branch
        %233 = sbr.rel (%p230) target = $region12
      $region11: #{tpu_custom_call.1} parent=5 // pred_region
        %s234 = ssub.s32 %s21, 1
        // Predicated region
        $region13: #{tpu_custom_call.1} parent=11 // pred_check
          %p235 = pneg %p82
        $region14: #{tpu_custom_call.1} parent=11 // pred_check_branch
          %237 = sbr.rel (%p235) target = $region16
        $region15: #{tpu_custom_call.1} parent=11 // pred_region
          %239 = vsyncadd [#allocation6], 0
          %s241 = sshll.u32 %s1, 4
          %s242 = int_to_ptr.hbm [resolvable:$true] %s241
          %s243 = sshll.u32 [#allocation5], 4
          %s244 = int_to_ptr.vmem [resolvable:$true] %s243
          %246 = dma.hbm_to_vmem [thread:$0]  %s242, 16, %s244, [#allocation6]
        $region16: #{tpu_custom_call.1} parent=11 // pred_fallthru
          _
        // Predicated region
        $region17: #{tpu_custom_call.1} parent=11 // pred_check
          %p247 = pneg %p103
        $region18: #{tpu_custom_call.1} parent=11 // pred_check_branch
          %249 = sbr.rel (%p247) target = $region20
        $region19: #{tpu_custom_call.1} parent=11 // pred_region
          _
        $region20: #{tpu_custom_call.1} parent=11 // pred_fallthru
          _
        // Predicated region
        $region21: #{tpu_custom_call.1} parent=11 // pred_check
          %p250 = pneg %p124
        $region22: #{tpu_custom_call.1} parent=11 // pred_check_branch
          %252 = sbr.rel (%p250) target = $region24
        $region23: #{tpu_custom_call.1} parent=11 // pred_region
          %254 = vsyncadd [#allocation6], 0
          %s255 = sshll.u32 %s3, 4
          %s256 = int_to_ptr.hbm [resolvable:$true] %s255
          %s257 = sshll.u32 [#allocation7], 4
          %s258 = int_to_ptr.vmem [resolvable:$true] %s257
          %263 = dma.hbm_to_vmem [thread:$0]  %s256, 256, %s258, [#allocation6], 64, 64, 4
        $region24: #{tpu_custom_call.1} parent=11 // pred_fallthru
          _
        // Predicated region
        $region25: #{tpu_custom_call.1} parent=11 // pred_check
          %p264 = pneg %p145
        $region26: #{tpu_custom_call.1} parent=11 // pred_check_branch
          %266 = sbr.rel (%p264) target = $region28
        $region27: #{tpu_custom_call.1} parent=11 // pred_region
          _
        $region28: #{tpu_custom_call.1} parent=11 // pred_fallthru
          _
        // Predicated region
        $region29: #{tpu_custom_call.1} parent=11 // pred_check
          %p267 = pneg %p166
        $region30: #{tpu_custom_call.1} parent=11 // pred_check_branch
          %269 = sbr.rel (%p267) target = $region32
        $region31: #{tpu_custom_call.1} parent=11 // pred_region
          _
        $region32: #{tpu_custom_call.1} parent=11 // pred_fallthru
          _
        // Predicated region
        $region33: #{tpu_custom_call.1} parent=11 // pred_check
          %p270 = pneg %p192
        $region34: #{tpu_custom_call.1} parent=11 // pred_check_branch
          %272 = sbr.rel (%p270) target = $region36
        $region35: #{tpu_custom_call.1} parent=11 // pred_region
          %274 = vsyncadd [#allocation9], 0
          %s275 = smul.addr %s31, 8
          %s276 = scalar_lea.hbm %s6, %s275
          %s278 = sshll.u32 %s276, 4
          %s279 = int_to_ptr.hbm [resolvable:$true] %s278
          %s280 = sshll.u32 [#allocation8], 4
          %s281 = int_to_ptr.vmem [resolvable:$true] %s280
          %283 = dma.hbm_to_vmem [thread:$0]  %s279, 128, %s281, [#allocation9]
        $region36: #{tpu_custom_call.1} parent=11 // pred_fallthru
          _
      $region12: #{tpu_custom_call.1} parent=5 // pred_fallthru
        _
      %p284 = scmp.lt.s32.totalorder %s21, 2
      // Predicated region
      $region37: #{tpu_custom_call.1} parent=5 // pred_check
        %p285 = pneg %p284
      $region38: #{tpu_custom_call.1} parent=5 // pred_check_branch
        %287 = sbr.rel (%p285) target = $region40
      $region39: #{tpu_custom_call.1} parent=5 // pred_region
        // Predicated region
        $region41: #{tpu_custom_call.1} parent=39 // pred_check
          %p288 = pneg %p55
        $region42: #{tpu_custom_call.1} parent=39 // pred_check_branch
          %290 = sbr.rel (%p288) target = $region44
        $region43: #{tpu_custom_call.1} parent=39 // pred_region
          %s291 = sand.u32 %s45, 1
          %s292 = scalar_lea.sflag [#allocation3], %s291
          %s293 = sand.u32 %s45, 1
          %s294 = smul.addr %s293, 4
          %s295 = scalar_lea.vmem [#allocation2], %s294
          %297 = vsyncadd %s292, 0
          %s298 = sadd.s32 %s29, %s28
          %s299 = smul.addr %s298, 4
          %s300 = scalar_lea.hbm %s0, %s299
          %s302 = sshll.u32 %s300, 4
          %s303 = int_to_ptr.hbm [resolvable:$true] %s302
          %s304 = sshll.u32 %s295, 4
          %s305 = int_to_ptr.vmem [resolvable:$true] %s304
          %307 = dma.hbm_to_vmem [thread:$0]  %s303, 64, %s305, %s292
        $region44: #{tpu_custom_call.1} parent=39 // pred_fallthru
          _
      $region40: #{tpu_custom_call.1} parent=5 // pred_fallthru
        _
      %p308 = scmp.le.s32.totalorder 1, %s21
      %p309 = scmp.lt.s32.totalorder %s21, 3
      %p310 = pnand %p308, %p309
      %p311 = pneg %p310
      // Predicated region
      $region45: #{tpu_custom_call.1} parent=5 // pred_check
        _
      $region46: #{tpu_custom_call.1} parent=5 // pred_check_branch
        %313 = sbr.rel (%p310) target = $region48
      $region47: #{tpu_custom_call.1} parent=5 // pred_region
        %s314 = ssub.s32 %s21, 1
        %s315 = sand.u32 %s48, 1
        %s316 = scalar_lea.sflag [#allocation3], %s315
        %s317 = sand.u32 %s48, 1
        %s318 = smul.addr %s317, 4
        %s319 = scalar_lea.vmem [#allocation2], %s318
        // Predicated region
        $region49: #{tpu_custom_call.1} parent=47 // pred_check
          %p320 = pneg %p61
        $region50: #{tpu_custom_call.1} parent=47 // pred_check_branch
          %322 = sbr.rel (%p320) target = $region52
        $region51: #{tpu_custom_call.1} parent=47 // pred_region
          %324 = dma.done %s316, 64
        $region52: #{tpu_custom_call.1} parent=47 // pred_fallthru
          _
        // Predicated region
        $region53: #{tpu_custom_call.1} parent=47 // pred_check
          %p325 = pneg %p82
        $region54: #{tpu_custom_call.1} parent=47 // pred_check_branch
          %327 = sbr.rel (%p325) target = $region56
        $region55: #{tpu_custom_call.1} parent=47 // pred_region
          %329 = dma.done [#allocation6], 16
        $region56: #{tpu_custom_call.1} parent=47 // pred_fallthru
          _
        // Predicated region
        $region57: #{tpu_custom_call.1} parent=47 // pred_check
          %p330 = pneg %p124
        $region58: #{tpu_custom_call.1} parent=47 // pred_check_branch
          %332 = sbr.rel (%p330) target = $region60
        $region59: #{tpu_custom_call.1} parent=47 // pred_region
          %334 = dma.done [#allocation6], 256
        $region60: #{tpu_custom_call.1} parent=47 // pred_fallthru
          _
        // Predicated region
        $region61: #{tpu_custom_call.1} parent=47 // pred_check
          %p335 = pneg %p192
        $region62: #{tpu_custom_call.1} parent=47 // pred_check_branch
          %337 = sbr.rel (%p335) target = $region64
        $region63: #{tpu_custom_call.1} parent=47 // pred_region
          %339 = dma.done [#allocation9], 128
        $region64: #{tpu_custom_call.1} parent=47 // pred_fallthru
          _
        %s340 = sand.u32 %s48, 1
        %s341 = scalar_lea.sflag [#allocation3], %s340
        %s342 = sand.u32 %s48, 1
        %s343 = smul.addr %s342, 4
        %s344 = scalar_lea.vmem [#allocation2], %s343
        %p345 = pneg %p61
        %p346 = pneg %p58
        %p347 = pneg %p82
        %p348 = pneg %p79
        %p349 = pneg %p103
        %p350 = pneg %p100
        %p351 = pneg %p124
        %p352 = pneg %p121
        %p353 = pneg %p145
        %p354 = pneg %p142
        %p355 = pneg %p166
        %p356 = pneg %p163
        %p357 = pneg %p192
        %p358 = pneg %p189
        %p359 = pneg %p220
        %p360 = pneg %p217
        %s361 = sand.u32 %s207, 1
        %s362 = scalar_lea.sflag [#allocation4], %s361
        %s363 = sand.u32 %s207, 1
        %s364 = smul.addr %s363, 8
        %s365 = scalar_lea.vmem [#allocation10], %s364
        %v367 = vld [vmem:[%s319] sm:$0xf]
        %v368 = vunpack.c.l.bf16 %v367
        %vm369 = vcmask 261120
        %v370 = vsel %vm369, %v368, 0.0
        %371 = vadd.xlane.f32.xlu0 %v370
        %v372 = vpop.xlane.xlu0 %371
        %v373 = vmul.f32 %v372, 0.03125
        %v374 = vsub.f32 %v368, %v373
        %v375 = vmul.f32 %v374, %v374
        %v376 = vsel %vm369, %v375, 0.0
        %377 = vadd.xlane.f32.xlu0 %v376
        %v378 = vpop.xlane.xlu0 %377
        %v379 = vmul.f32 %v378, 0.03125
        %v380 = vadd.f32 %v379, 1e-12
        %v381 = vrsqrt.pop %v380
        %v382 = vmul.f32 %v381, %v380
        %v383 = vmul.f32 %v382, %v381
        %v384 = vmul.f32 0.5, %v383
        %v385 = vsub.f32 1.5, %v384
        %v386 = vmul.f32 %v381, %v385
        %vm387 = vweird.f32 %v380
        %vm388 = vweird.f32 %v381
        %vm389 = vmor %vm387, %vm388
        %v390 = vsel %vm389, %v381, %v386
        %v391 = vmul.f32 %v374, %v390
        %v392 = vld [vmem:[#allocation5] sm:$0x1]
        %v394 = vperm.slane %v392, 0
        %v396 = vmul.f32 %v394, %v391
        %v397 = vld [vmem:[%s2] sm:$0x1]
        %v399 = vperm.slane %v397, 0
        %v401 = vadd.f32 %v396, %v399
        %v402 = vpack.c.bf16 %v401, %v401
        %v403 = vld [vmem:[#allocation7] sm:$0xf]
        %v404 = vld [vmem:[#allocation7 + $0x4] sm:$0xf]
        %v405 = vld [vmem:[#allocation7 + $0x8] sm:$0xf]
        %v406 = vld [vmem:[#allocation7 + $0xc] sm:$0xf]
        %v407 = vld [vmem:[%s4] sm:$0x1]
        %v409 = vperm.slane %v407, 0
        %v415 = vunpack.c.l.b16 %v403
        %v416 = vunpack.c.l.b16 %v404
        %v417 = vunpack.c.l.b16 %v405
        %v418 = vunpack.c.l.b16 %v406
        %v419 = vpack.c.b16 %v416, %v415
        %v420 = vpack.c.b16 %v418, %v417
        %v424 = vsel %vm369, %v402, 0
        %426 = vmatpush.bf16.msra.mxu0 0
        %427 = vmatpush.bf16.msra.mxu0 0
        %428 = vmatpush.bf16.msra.mxu0 0
        %429 = vmatpush.bf16.msra.mxu0 0
        %430 = vmatpush.bf16.msra.mxu0 0
        %431 = vmatpush.bf16.msra.mxu0 0
        %432 = vmatpush.bf16.msra.mxu0 %v420
        %433 = vmatpush.bf16.msra.mxu0 %v419
        %434 = vmatmul.bf16.gmra.mxu0 %v424
        %v435 = vpop.f32.mrf.mxu0
        %v436 = vadd.f32 %v409, %v435
        %v437 = vpop.f32.mrf.mxu0
        %438 = vdwg.mxu0
        %v439 = vmax.f32 %v436, 0.0
        %vm440 = vcmask 523264
        %v441 = vsel %vm440, %v439, 0.0
        %442 = vadd.xlane.f32.xlu0 %v441
        %v443 = vpop.xlane.xlu0 %442
        %v444 = vmul.f32 %v443, 0.015625
        %v445 = vsub.f32 %v439, %v444
        %v446 = vmul.f32 %v445, %v445
        %v447 = vsel %vm440, %v446, 0.0
        %448 = vadd.xlane.f32.xlu0 %v447
        %v449 = vpop.xlane.xlu0 %448
        %v450 = vmul.f32 %v449, 0.015625
        %v451 = vld [vmem:[%s5] sm:$0x1]
        %v452 = vadd.f32 %v450, 1e-12
        %v453 = vrsqrt.pop %v452
        %v454 = vmul.f32 %v453, %v452
        %v455 = vmul.f32 %v454, %v453
        %v456 = vmul.f32 0.5, %v455
        %v457 = vsub.f32 1.5, %v456
        %v458 = vmul.f32 %v453, %v457
        %vm459 = vweird.f32 %v452
        %vm460 = vweird.f32 %v453
        %vm461 = vmor %vm459, %vm460
        %v462 = vsel %vm461, %v453, %v458
        %v463 = vmul.f32 %v445, %v462
        %v465 = vperm.slane %v451, 0
        %v467 = vmul.f32 %v465, %v463
        %v468 = vld [vmem:[#allocation8] sm:$0xff]
        %v469 = vadd.f32 %v467, %v468
        %470 = vst.msk [vmem:[%s365] sm:$0xff] %vm440, %v469
        %s471 = sand.u32 %s207, 1
        %s472 = scalar_lea.sflag [#allocation4], %s471
        %s473 = sand.u32 %s207, 1
        %s474 = smul.addr %s473, 8
        %s475 = scalar_lea.vmem [#allocation10], %s474
        // Predicated region
        $region65: #{tpu_custom_call.1} parent=47 // pred_check
          %p476 = pneg %p217
        $region66: #{tpu_custom_call.1} parent=47 // pred_check_branch
          %478 = sbr.rel (%p476) target = $region68
        $region67: #{tpu_custom_call.1} parent=47 // pred_region
          %480 = vsyncadd %s472, 0
          %s481 = sadd.s32 %s31, %s30
          %s482 = smul.addr %s481, 8
          %s483 = scalar_lea.hbm %s7, %s482
          %s485 = sshll.u32 %s475, 4
          %s486 = int_to_ptr.vmem [resolvable:$true] %s485
          %s487 = sshll.u32 %s483, 4
          %s488 = int_to_ptr.hbm [resolvable:$true] %s487
          %490 = dma.vmem_to_hbm [thread:$0]  %s486, 128, %s488, %s472
        $region68: #{tpu_custom_call.1} parent=47 // pred_fallthru
          _
      $region48: #{tpu_custom_call.1} parent=5 // pred_fallthru
        _
      %p491 = scmp.le.s32.totalorder 2, %s21
      // Predicated region
      $region69: #{tpu_custom_call.1} parent=5 // pred_check
        %p492 = pneg %p491
      $region70: #{tpu_custom_call.1} parent=5 // pred_check_branch
        %494 = sbr.rel (%p492) target = $region72
      $region71: #{tpu_custom_call.1} parent=5 // pred_region
        %s495 = ssub.s32 %s21, 2
        // Predicated region
        $region73: #{tpu_custom_call.1} parent=71 // pred_check
          %p496 = pneg %p223
        $region74: #{tpu_custom_call.1} parent=71 // pred_check_branch
          %498 = sbr.rel (%p496) target = $region76
        $region75: #{tpu_custom_call.1} parent=71 // pred_region
          %s499 = sand.u32 %s208, 1
          %s500 = scalar_lea.sflag [#allocation4], %s499
          %s501 = sand.u32 %s208, 1
          %s502 = smul.addr %s501, 8
          %s503 = scalar_lea.vmem [#allocation10], %s502
          %505 = dma.done %s500, 128
        $region76: #{tpu_custom_call.1} parent=71 // pred_fallthru
          _
      $region72: #{tpu_custom_call.1} parent=5 // pred_fallthru
        _
    $region6: #{tpu_custom_call.1} parent=1 // loop_footer
      %s25 = sadd.s32 1, %s21
    $region7: #{tpu_custom_call.1} parent=1 // loop_footer_branch
      %20 = sbr.rel target = $region3
    $region8: #{tpu_custom_call.1} parent=1 // loop_exit
      _
    %506 = vsyncpa [#allocation3], 1
    %s507 = scalar_lea.sflag [#allocation3], 1
    %508 = vsyncpa %s507, 1
    %509 = vsyncpa [#allocation6], 1
    %510 = vsyncpa [#allocation9], 1
    %511 = vsyncpa [#allocation4], 1
    %s512 = scalar_lea.sflag [#allocation4], 1
    %513 = vsyncpa %s512, 1

</llo_original>
